<compile_context>
chip_gen: v5e
topology: v5e:2x2
jax: 0.10.0
libtpu: 0.0.40
codegen_flags: <defaults>
</compile_context>

<pallas_src>
import math

import jax
import jax.numpy as jnp
from jax import lax
from jax.experimental import pallas as pl
from jax.experimental.pallas import tpu as pltpu


_MASK_VALUE = -1e30                      # large finite negative (safe causal mask)
_VMEM_LIMIT = 48 * 1024 * 1024           # explicit scoped-VMEM budget (< v7x 64 MiB)


# ---------------------------------------------------------------------------
# Kernel 1: fused QKV projection as a K-tiled GEMM.
#   x:(B,T,C) @ w:(3,C,C) + b:(3,1,C)  ->  qkv:(3,B,T,C)
# grid = (B, T-tiles, 3, K-tiles); K (contraction) is last / 'arbitrary'.
# ---------------------------------------------------------------------------
def _qkv_kernel(x_ref, w_ref, b_ref, o_ref, acc_ref):
    kc = pl.program_id(3)

    @pl.when(kc == 0)
    def _init():
        acc_ref[...] = jnp.zeros(acc_ref.shape, jnp.float32)

    acc_ref[...] += jnp.dot(x_ref[0], w_ref[0],
                            preferred_element_type=jnp.float32)

    @pl.when(kc == pl.num_programs(3) - 1)
    def _finalize():
        # bias broadcast + add happens once per output tile, not per K step
        o_ref[0, 0] = acc_ref[...] + b_ref[0]


def qkv_projection(x, w3, b3, *, tm=128, tkc=512):
    B, T, C = x.shape
    tm = min(tm, T)
    tkc = min(tkc, C)
    assert T % tm == 0 and C % tkc == 0, "T and C must divide the chosen tiles"
    nm, nkc = T // tm, C // tkc

    return pl.pallas_call(
        _qkv_kernel,
        out_shape=jax.ShapeDtypeStruct((3, B, T, C), jnp.float32),
        grid_spec=pltpu.PrefetchScalarGridSpec(
            num_scalar_prefetch=0,
            grid=(B, nm, 3, nkc),
            in_specs=[
                pl.BlockSpec((1, tm, tkc), lambda b, m, j, kc: (b, m, kc)),
                pl.BlockSpec((1, tkc, C), lambda b, m, j, kc: (j, kc, 0)),
                pl.BlockSpec((1, 1, C), lambda b, m, j, kc: (j, 0, 0)),
            ],
            out_specs=pl.BlockSpec((1, 1, tm, C),
                                   lambda b, m, j, kc: (j, b, m, 0)),
            scratch_shapes=[pltpu.VMEM((tm, C), jnp.float32)],
        ),
        compiler_params=pltpu.CompilerParams(
            dimension_semantics=("parallel", "parallel", "parallel", "arbitrary"),
            vmem_limit_bytes=_VMEM_LIMIT,
        ),
    )(x, w3, b3)


# ---------------------------------------------------------------------------
# Kernel 2: flash-style causal attention, all heads batched per grid step.
#   qkv:(3,B,T,H,D)  ->  out:(B,T,H,D)
# grid = (B, Q-tiles, KV-tiles); KV is last / 'arbitrary' with online softmax.
# ---------------------------------------------------------------------------
def _make_attn_kernel(H, tq, tk, scale):
    def _attn_kernel(q_ref, k_ref, v_ref, o_ref, m_ref, l_ref, acc_ref):
        qi = pl.program_id(1)
        ki = pl.program_id(2)

        @pl.when(ki == 0)
        def _init():
            m_ref[...] = jnp.full(m_ref.shape, -jnp.inf, jnp.float32)
            l_ref[...] = jnp.zeros(l_ref.shape, jnp.float32)
            acc_ref[...] = jnp.zeros(acc_ref.shape, jnp.float32)

        # Causal block skip: KV blocks strictly above the diagonal contribute
        # nothing -> skip all MXU/VPU work (their DMA is elided too, because
        # the k/v index_maps clamp the block index; see causal_attention()).
        @pl.when(ki <= qi)
        def _compute():
            # (tq, H, D) -> (H, tq, D): heads become the batch dim of one
            # batched matmul; 1/sqrt(D) is folded into q (T*C mults, not T*T).
            q = jnp.swapaxes(q_ref[0, 0], 0, 1) * scale      # (H, tq, D)
            k = jnp.swapaxes(k_ref[0, 0], 0, 1)              # (H, tk, D)
            v = jnp.swapaxes(v_ref[0, 0], 0, 1)              # (H, tk, D)

            # contract the D axes directly -- no explicit k.T / XLU transpose
            s = lax.dot_general(q, k, (((2,), (2,)), ((0,), (0,))),
                                preferred_element_type=jnp.float32)  # (H,tq,tk)

            # mask with global indices (only the diagonal block is partial)
            rows = qi * tq + lax.broadcasted_iota(jnp.int32, (H, tq, tk), 1)
            cols = ki * tk + lax.broadcasted_iota(jnp.int32, (H, tq, tk), 2)
            s = jnp.where(rows >= cols, s, _MASK_VALUE)

            m_prev = m_ref[...]
            m_new = jnp.maximum(m_prev, jnp.max(s, axis=-1, keepdims=True))
            alpha = jnp.exp(m_prev - m_new)
            p = jnp.exp(s - m_new)
            l_ref[...] = alpha * l_ref[...] + jnp.sum(p, axis=-1, keepdims=True)
            acc_ref[...] = alpha * acc_ref[...] + lax.dot_general(
                p, v, (((2,), (1,)), ((0,), (0,))),
                preferred_element_type=jnp.float32)                  # (H,tq,D)
            m_ref[...] = m_new

        # The diagonal block is the last one that contributes to this Q tile.
        @pl.when(ki == qi)
        def _finalize():
            inv_l = pl.reciprocal(l_ref[...], approx=True)   # EUP slot, ~free
            o_ref[0] = jnp.swapaxes(acc_ref[...] * inv_l, 0, 1)   # (tq, H, D)

    return _attn_kernel


def causal_attention(qkv, *, tile=128):
    # qkv: (3, B, T, H, D).  q/k/v selection and the head split are addressed
    # purely via BlockSpec index_maps -- no HBM transposes in the wrapper.
    _, B, T, H, D = qkv.shape
    tq = tk = min(tile, T)
    assert T % tq == 0
    nq = nk = T // tq
    scale = 1.0 / math.sqrt(D)

    q_spec = pl.BlockSpec((1, 1, tq, H, D), lambda b, qi, ki: (0, b, qi, 0, 0))
    # Clamp the KV block index so fully-masked (skipped) blocks re-use the
    # previously fetched block => no HBM DMA for the skipped upper triangle.
    # (If KV DMA latency were exposed for long T / small D, add
    #  pipeline_mode=pl.Buffered(3) to these two specs.)
    k_spec = pl.BlockSpec((1, 1, tk, H, D),
                          lambda b, qi, ki: (1, b, jnp.minimum(ki, qi), 0, 0))
    v_spec = pl.BlockSpec((1, 1, tk, H, D),
                          lambda b, qi, ki: (2, b, jnp.minimum(ki, qi), 0, 0))

    return pl.pallas_call(
        _make_attn_kernel(H, tq, tk, scale),
        out_shape=jax.ShapeDtypeStruct((B, T, H, D), jnp.float32),
        grid_spec=pltpu.PrefetchScalarGridSpec(
            num_scalar_prefetch=0,
            grid=(B, nq, nk),
            in_specs=[q_spec, k_spec, v_spec],
            out_specs=pl.BlockSpec((1, tq, H, D),
                                   lambda b, qi, ki: (b, qi, 0, 0)),
            scratch_shapes=[
                pltpu.VMEM((H, tq, 1), jnp.float32),   # running max   m
                pltpu.VMEM((H, tq, 1), jnp.float32),   # running denom l
                pltpu.VMEM((H, tq, D), jnp.float32),   # output accumulator
            ],
        ),
        compiler_params=pltpu.CompilerParams(
            dimension_semantics=("parallel", "parallel", "arbitrary"),
            vmem_limit_bytes=_VMEM_LIMIT,
        ),
    )(qkv, qkv, qkv)


# ---------------------------------------------------------------------------
# Module wrapper
# ---------------------------------------------------------------------------
def init_params(key, num_heads, head_hidden_dim):
    C = num_heads * head_hidden_dim
    k1, k2, k3, k4 = jax.random.split(key, 4)
    bound = 1.0 / math.sqrt(C)
    # to_QKV: Linear(C, 3C).  Stored as (3, C, C) with w_qkv[j] = W[j*C:(j+1)*C].T
    # so the kernel computes x @ w_qkv[j] + b_qkv[j]  (j = 0,1,2 -> q,k,v),
    # matching torch's x @ W.T + b followed by .split(C, dim=2).
    w_qkv = jax.random.uniform(k1, (3, C, C), jnp.float32, -bound, bound)
    b_qkv = jax.random.uniform(k2, (3, 1, C), jnp.float32, -bound, bound)
    # self.projection exists in __init__ but is never applied in forward();
    # initialized only for parameter-shape fidelity.
    w_proj = jax.random.uniform(k3, (C, C), jnp.float32, -bound, bound)
    b_proj = jax.random.uniform(k4, (C,), jnp.float32, -bound, bound)
    return {"w_qkv": w_qkv, "b_qkv": b_qkv, "w_proj": w_proj, "b_proj": b_proj}


def multi_head_attention_forward(params, x, num_heads):
    B, T, C = x.shape
    H = num_heads
    D = C // H
    qkv = qkv_projection(x, params["w_qkv"], params["b_qkv"])   # (3, B, T, C)
    qkv = qkv.reshape(3, B, T, H, D)     # contiguous reshape: free, no HBM pass
    out = causal_attention(qkv)                                  # (B, T, H, D)
    # dropout_p is a no-op at inference time and self.projection is unused in
    # the reference forward, so neither appears in the hot path.
    return out.reshape(B, T, C)          # contiguous reshape: free merge of heads


# ---------------------------------------------------------------------------
# Pure-JAX reference for a sanity check
# ---------------------------------------------------------------------------
def reference_forward(params, x, num_heads):
    B, T, C = x.shape
    H, D = num_heads, C // num_heads
    qkv = jnp.einsum("btc,jcn->jbtn", x, params["w_qkv"]) + params["b_qkv"][:, None]
    q, k, v = (jnp.transpose(qkv[j].reshape(B, T, H, D), (0, 2, 1, 3))
               for j in range(3))
    s = jnp.einsum("bhqd,bhkd->bhqk", q, k) / math.sqrt(D)
    causal = jnp.tril(jnp.ones((T, T), dtype=bool))
    s = jnp.where(causal, s, -jnp.inf)
    p = jax.nn.softmax(s, axis=-1)
    o = jnp.einsum("bhqk,bhkd->bhqd", p, v)
    return jnp.transpose(o, (0, 2, 1, 3)).reshape(B, T, C)


if __name__ == "__main__":
    # small config: num_heads=4, head_hidden_dim=16 -> hidden=64, seq=8, batch=2
    num_heads = 4
    head_hidden_dim = 16
    seq_length = 8
    batch = 2
    hidden_dim = num_heads * head_hidden_dim

    key = jax.random.PRNGKey(0)
    kp, kx = jax.random.split(key)
    params = init_params(kp, num_heads, head_hidden_dim)
    x = jax.random.normal(kx, (batch, seq_length, hidden_dim), jnp.float32)

    out = multi_head_attention_forward(params, x, num_heads)
    out = jax.block_until_ready(out)

    ref = reference_forward(params, x, num_heads)
    assert out.shape == (batch, seq_length, hidden_dim)
    # approx reciprocal (EUP) in the softmax finalize => slightly looser tol
    max_diff = float(jnp.max(jnp.abs(out - ref)))
    assert jnp.allclose(out, ref, atol=2e-3, rtol=2e-3), (
        f"mismatch vs reference: max |diff| = {max_diff}")

    print("KERNEL_OK")
</pallas_src>

<mosaic_0001>
module attributes {stable_mosaic.version = 11 : i64} {
  func.func @_qkv_kernel(%arg0: i32, %arg1: i32, %arg2: i32, %arg3: i32, %arg4: memref<1x8x64xf32, #tpu.memory_space<vmem>>, %arg5: memref<1x64x64xf32, #tpu.memory_space<vmem>>, %arg6: memref<1x1x64xf32, #tpu.memory_space<vmem>>, %arg7: memref<1x1x8x64xf32, #tpu.memory_space<vmem>>, %arg8: memref<8x64xf32, #tpu.memory_space<vmem>>) attributes {dimension_semantics = [#tpu.dimension_semantics<parallel>, #tpu.dimension_semantics<parallel>, #tpu.dimension_semantics<parallel>, #tpu.dimension_semantics<arbitrary>], iteration_bounds = array<i64: 2, 1, 3, 1>, scalar_prefetch = 0 : i64, scratch_operands = 1 : i64, tpu.core_type = #tpu.core_type<tc>, window_params = [{transform_indices = @transform_0, window_bounds = array<i64: 1, 8, 64>}, {transform_indices = @transform_1, window_bounds = array<i64: 1, 64, 64>}, {transform_indices = @transform_2, window_bounds = array<i64: 1, 1, 64>}, {transform_indices = @transform_3, window_bounds = array<i64: 1, 1, 8, 64>}]} {
    %c0_i32 = arith.constant 0 : i32
    %0 = arith.cmpi eq, %arg3, %c0_i32 : i32
    %1 = arith.extui %0 : i1 to i32
    %c0_i32_0 = arith.constant 0 : i32
    %2 = arith.cmpi ne, %1, %c0_i32_0 : i32
    scf.if %2 {
      %cst_12 = arith.constant 0.000000e+00 : f32
      %14 = vector.broadcast %cst_12 : f32 to vector<8x64xf32>
      %c0_13 = arith.constant 0 : index
      %c0_14 = arith.constant 0 : index
      %15 = vector.load %arg8[%c0_13, %c0_14] : memref<8x64xf32, #tpu.memory_space<vmem>>, vector<8x64xf32>
      tpu.vector_store %arg8[%c0_13, %c0_14], %14 {strides = array<i32>} : memref<8x64xf32, #tpu.memory_space<vmem>>, vector<8x64xf32>,
    } else {
    }
    %c0 = arith.constant 0 : index
    %c0_1 = arith.constant 0 : index
    %3 = vector.load %arg8[%c0, %c0_1] : memref<8x64xf32, #tpu.memory_space<vmem>>, vector<8x64xf32>
    %c0_2 = arith.constant 0 : index
    %c0_3 = arith.constant 0 : index
    %c0_4 = arith.constant 0 : index
    %4 = vector.load %arg4[%c0_2, %c0_3, %c0_4] : memref<1x8x64xf32, #tpu.memory_space<vmem>>, vector<1x8x64xf32>
    %5 = vector.shape_cast %4 : vector<1x8x64xf32> to vector<8x64xf32>
    %c0_5 = arith.constant 0 : index
    %c0_6 = arith.constant 0 : index
    %c0_7 = arith.constant 0 : index
    %6 = vector.load %arg5[%c0_5, %c0_6, %c0_7] : memref<1x64x64xf32, #tpu.memory_space<vmem>>, vector<1x64x64xf32>
    %7 = vector.shape_cast %6 : vector<1x64x64xf32> to vector<64x64xf32>
    %cst = arith.constant dense<0.000000e+00> : vector<8x64xf32>
    %8 = tpu.matmul %5, %7, %cst {dimension_numbers = #tpu.dot_dimension_numbers<[1], [0], [0], [1], [0, 0, 1, 1], [], []>} : vector<8x64xf32>, vector<64x64xf32>, vector<8x64xf32> -> vector<8x64xf32>
    %9 = arith.addf %3, %8 : vector<8x64xf32>
    %c0_8 = arith.constant 0 : index
    %c0_9 = arith.constant 0 : index
    %10 = vector.load %arg8[%c0_8, %c0_9] : memref<8x64xf32, #tpu.memory_space<vmem>>, vector<8x64xf32>
    tpu.vector_store %arg8[%c0_8, %c0_9], %9 {strides = array<i32>} : memref<8x64xf32, #tpu.memory_space<vmem>>, vector<8x64xf32>,
    %c0_i32_10 = arith.constant 0 : i32
    %11 = arith.cmpi eq, %arg3, %c0_i32_10 : i32
    %12 = arith.extui %11 : i1 to i32
    %c0_i32_11 = arith.constant 0 : i32
    %13 = arith.cmpi ne, %12, %c0_i32_11 : i32
    scf.if %13 {
      %c0_12 = arith.constant 0 : index
      %c0_13 = arith.constant 0 : index
      %14 = vector.load %arg8[%c0_12, %c0_13] : memref<8x64xf32, #tpu.memory_space<vmem>>, vector<8x64xf32>
      %c0_14 = arith.constant 0 : index
      %c0_15 = arith.constant 0 : index
      %c0_16 = arith.constant 0 : index
      %15 = vector.load %arg6[%c0_14, %c0_15, %c0_16] : memref<1x1x64xf32, #tpu.memory_space<vmem>>, vector<1x1x64xf32>
      %16 = vector.shape_cast %15 : vector<1x1x64xf32> to vector<1x64xf32>
      %17 = vector.broadcast %16 : vector<1x64xf32> to vector<8x64xf32>
      %18 = arith.addf %14, %17 : vector<8x64xf32>
      %c0_17 = arith.constant 0 : index
      %c0_18 = arith.constant 0 : index
      %c0_19 = arith.constant 0 : index
      %c0_20 = arith.constant 0 : index
      %19 = vector.load %arg7[%c0_17, %c0_18, %c0_19, %c0_20] : memref<1x1x8x64xf32, #tpu.memory_space<vmem>>, vector<1x1x8x64xf32>
      %20 = vector.shape_cast %19 : vector<1x1x8x64xf32> to vector<8x64xf32>
      %21 = vector.shape_cast %18 : vector<8x64xf32> to vector<1x1x8x64xf32>
      tpu.vector_store %arg7[%c0_17, %c0_18, %c0_19, %c0_20], %21 {strides = array<i32>} : memref<1x1x8x64xf32, #tpu.memory_space<vmem>>, vector<1x1x8x64xf32>,
    } else {
    }
    return
  }
  func.func @transform_0(%arg0: i32, %arg1: i32, %arg2: i32, %arg3: i32) -> (i32, i32, i32) {
    %c0_i32 = arith.constant 0 : i32
    return %arg0, %arg1, %arg3 : i32, i32, i32
  }
  func.func @transform_1(%arg0: i32, %arg1: i32, %arg2: i32, %arg3: i32) -> (i32, i32, i32) {
    %c0_i32 = arith.constant 0 : i32
    %c0_i32_0 = arith.constant 0 : i32
    return %arg2, %arg3, %c0_i32 : i32, i32, i32
  }
  func.func @transform_2(%arg0: i32, %arg1: i32, %arg2: i32, %arg3: i32) -> (i32, i32, i32) {
    %c0_i32 = arith.constant 0 : i32
    %c0_i32_0 = arith.constant 0 : i32
    %c0_i32_1 = arith.constant 0 : i32
    return %arg2, %c0_i32, %c0_i32_0 : i32, i32, i32
  }
  func.func @transform_3(%arg0: i32, %arg1: i32, %arg2: i32, %arg3: i32) -> (i32, i32, i32, i32) {
    %c0_i32 = arith.constant 0 : i32
    %c0_i32_0 = arith.constant 0 : i32
    return %arg2, %arg0, %arg1, %c0_i32 : i32, i32, i32, i32
  }
}

</mosaic_0001>

<llo_original>
// kernel: tpu_custom_call.1
$region0: #{tpu_custom_call.1}
  #allocation0 [shape = 'u32[]', space=smem, size = 0x4, offset = 0x4, fixed_abs, tag = 'smem constant byte address 0x4 - core index']
  #allocation1 [shape = 'u32[72,128]{1,0:T(1,128)}', space=vmem, size = 0x9000, scoped, tag = 'internal scratch']
  #allocation2 [shape = 'f32[8,64]{1,0:T(8,128)}', space=vmem, size = 0x1000, scoped, tag = 'scratch operand']
  %s0 = inlined_call_operand.hbm [shape: f32[2,8,64], index: 0, kind: input, shape index: {}]
  %s1 = inlined_call_operand.hbm [shape: f32[3,64,64], index: 1, kind: input, shape index: {}]
  %s2 = inlined_call_operand.hbm [shape: f32[3,1,64], index: 2, kind: input, shape index: {}]
  %s3 = inlined_call_operand.hbm [shape: f32[3,2,8,64], index: 3, kind: output, shape index: {}]
  %s4 = sld [smem:[#allocation0]]
  $region65: #{tpu_custom_call.1} parent=0
    _
  %s6 = ssub.s32 1, %s4
  %s7 = scalar_select 0, %s6, %s4
  $region1: #{tpu_custom_call.1} parent=0
    #allocation3 [shape = 'u8[8192]{0}', space=vmem, size = 0x2000, scoped, tag = 'input window, operand 0']
    #allocation4 [shape = 's32[2]{0}', space=sflag, size = 0x8, scoped, tag = 'scoped memory for tpu_custom_call.1']
    #allocation5 [shape = 's32[2]{0}', space=sflag, size = 0x8, scoped, tag = 'scoped memory for tpu_custom_call.1']
    #allocation6 [shape = 'u8[65536]{0}', space=vmem, size = 0x10000, scoped, tag = 'input window, operand 1']
    #allocation7 [shape = 's32[2]{0}', space=sflag, size = 0x8, scoped, tag = 'scoped memory for tpu_custom_call.1']
    #allocation8 [shape = 'u8[1024]{0}', space=vmem, size = 0x400, scoped, tag = 'input window, operand 2']
    #allocation9 [shape = 'u8[8192]{0}', space=vmem, size = 0x2000, scoped, tag = 'output window, operand 0']
    %8 = vsyncpa [#allocation4], 0
    %s9 = scalar_lea.sflag [#allocation4], 1
    %10 = vsyncpa %s9, 0
    %11 = vsyncpa [#allocation7], 0
    %s12 = scalar_lea.sflag [#allocation7], 1
    %13 = vsyncpa %s12, 0
    %14 = vsyncpa [#allocation5], 0
    %s15 = scalar_lea.sflag [#allocation5], 1
    %16 = vsyncpa %s15, 0
    loop: start=0, step=1, limit=8
    $region2: #{tpu_custom_call.1} parent=1 // loop_pre_header
      _
    $region3: #{tpu_custom_call.1} parent=1 // loop_header
      %s18 = sphi 0, %s22
      %p19 = scmp.ge.s32.totalorder %s18, 8
      %s25 = sphi 0, %s51
      %s26 = sphi 0, %s47
      %s27 = sphi 0, %s43
      %s28 = sphi 0, %s39
      %s29 = sphi 0, %s25
      %s30 = sphi 0, %s26
      %s31 = sphi 0, %s27
      %s32 = sphi 0, %s28
      %s33 = sphi 0, %s29
      %s34 = sphi 0, %s30
      %s35 = sphi 0, %s31
      %s36 = sphi 0, %s32
      %s58 = sphi 0, %s60
      %s61 = sphi 0, %s58
      %s62 = sphi 0, %s61
      %s78 = sphi 0, %s62
      %s86 = sphi 0, %s88
      %s89 = sphi 0, %s86
      %s90 = sphi 0, %s89
      %s106 = sphi 0, %s90
      %s112 = sphi 0, %s114
      %s115 = sphi 0, %s112
      %s116 = sphi 0, %s115
      %s132 = sphi 0, %s116
      %s142 = sphi 0, %s144
      %s145 = sphi 0, %s142
      %s146 = sphi 0, %s145
      %s162 = sphi 0, %s146
    $region4: #{tpu_custom_call.1} parent=1 // loop_header_branch
      %21 = sbr.rel (%p19) target = $region8
    $region5: #{tpu_custom_call.1} parent=1 // loop_body
      %s23 = ssub.s32 %s18, 1
      %s24 = ssub.s32 %s18, 2
      %s37 = sadd.s32 1, %s28
      %p38 = scmp.ge.s32.totalorder %s37, 1
      %s39 = scalar_select %p38, 0, %s37
      %s40 = sadd.s32 1, %s27
      %s41 = scalar_select %p38, %s40, %s27
      %p42 = scmp.ge.s32.totalorder %s41, 3
      %s43 = scalar_select %p42, 0, %s41
      %s44 = sadd.s32 1, %s26
      %s45 = scalar_select %p42, %s44, %s26
      %p46 = scmp.ge.s32.totalorder %s45, 1
      %s47 = scalar_select %p46, 0, %s45
      %s48 = sadd.s32 1, %s25
      %s49 = scalar_select %p46, %s48, %s25
      %p50 = scmp.ge.s32.totalorder %s49, 2
      %s51 = scalar_select %p50, 0, %s49
      %s52 = ssub.s32 %s25, %s51
      %s53 = ssub.s32 %s26, %s47
      %s54 = sor.u32 %s52, %s53
      %s55 = ssub.s32 %s28, %s39
      %s56 = sor.u32 %s54, %s55
      %p57 = scmp.eq.s32.totalorder %s56, 0
      %s59 = sadd.s32 %s58, 1
      %s60 = scalar_select %p57, %s58, %s59
      %p63 = pneg %p57
      %p64 = scmp.eq.s32.totalorder %s18, 5
      %p65 = por %p63, %p64
      %p66 = scmp.ne.s32.totalorder %s58, %s61
      %p67 = scmp.eq.s32.totalorder %s18, 0
      %p68 = por %p66, %p67
      %p69 = scmp.ne.s32.totalorder %s58, %s61
      %p70 = scmp.eq.s32.totalorder %s23, 5
      %p71 = por %p69, %p70
      %p72 = scmp.ne.s32.totalorder %s61, %s62
      %p73 = scmp.eq.s32.totalorder %s23, 0
      %p74 = por %p72, %p73
      %p75 = scmp.ne.s32.totalorder %s61, %s62
      %p76 = scmp.eq.s32.totalorder %s24, 5
      %p77 = por %p75, %p76
      %p79 = scmp.ne.s32.totalorder %s62, %s78
      %p80 = scmp.eq.s32.totalorder %s24, 0
      %p81 = por %p79, %p80
      %s82 = ssub.s32 %s27, %s43
      %s83 = ssub.s32 %s28, %s39
      %s84 = sor.u32 %s82, %s83
      %p85 = scmp.eq.s32.totalorder %s84, 0
      %s87 = sadd.s32 %s86, 1
      %s88 = scalar_select %p85, %s86, %s87
      %p91 = pneg %p85
      %p92 = scmp.eq.s32.totalorder %s18, 5
      %p93 = por %p91, %p92
      %p94 = scmp.ne.s32.totalorder %s86, %s89
      %p95 = scmp.eq.s32.totalorder %s18, 0
      %p96 = por %p94, %p95
      %p97 = scmp.ne.s32.totalorder %s86, %s89
      %p98 = scmp.eq.s32.totalorder %s23, 5
      %p99 = por %p97, %p98
      %p100 = scmp.ne.s32.totalorder %s89, %s90
      %p101 = scmp.eq.s32.totalorder %s23, 0
      %p102 = por %p100, %p101
      %p103 = scmp.ne.s32.totalorder %s89, %s90
      %p104 = scmp.eq.s32.totalorder %s24, 5
      %p105 = por %p103, %p104
      %p107 = scmp.ne.s32.totalorder %s90, %s106
      %p108 = scmp.eq.s32.totalorder %s24, 0
      %p109 = por %p107, %p108
      %s110 = ssub.s32 %s27, %s43
      %p111 = scmp.eq.s32.totalorder %s110, 0
      %s113 = sadd.s32 %s112, 1
      %s114 = scalar_select %p111, %s112, %s113
      %p117 = pneg %p111
      %p118 = scmp.eq.s32.totalorder %s18, 5
      %p119 = por %p117, %p118
      %p120 = scmp.ne.s32.totalorder %s112, %s115
      %p121 = scmp.eq.s32.totalorder %s18, 0
      %p122 = por %p120, %p121
      %p123 = scmp.ne.s32.totalorder %s112, %s115
      %p124 = scmp.eq.s32.totalorder %s23, 5
      %p125 = por %p123, %p124
      %p126 = scmp.ne.s32.totalorder %s115, %s116
      %p127 = scmp.eq.s32.totalorder %s23, 0
      %p128 = por %p126, %p127
      %p129 = scmp.ne.s32.totalorder %s115, %s116
      %p130 = scmp.eq.s32.totalorder %s24, 5
      %p131 = por %p129, %p130
      %p133 = scmp.ne.s32.totalorder %s116, %s132
      %p134 = scmp.eq.s32.totalorder %s24, 0
      %p135 = por %p133, %p134
      %s136 = ssub.s32 %s27, %s43
      %s137 = ssub.s32 %s25, %s51
      %s138 = sor.u32 %s136, %s137
      %s139 = ssub.s32 %s26, %s47
      %s140 = sor.u32 %s138, %s139
      %p141 = scmp.eq.s32.totalorder %s140, 0
      %s143 = sadd.s32 %s142, 1
      %s144 = scalar_select %p141, %s142, %s143
      %p147 = pneg %p141
      %p148 = scmp.eq.s32.totalorder %s18, 5
      %p149 = por %p147, %p148
      %p150 = scmp.ne.s32.totalorder %s142, %s145
      %p151 = scmp.eq.s32.totalorder %s18, 0
      %p152 = por %p150, %p151
      %p153 = scmp.ne.s32.totalorder %s142, %s145
      %p154 = scmp.eq.s32.totalorder %s23, 5
      %p155 = por %p153, %p154
      %p156 = scmp.ne.s32.totalorder %s145, %s146
      %p157 = scmp.eq.s32.totalorder %s23, 0
      %p158 = por %p156, %p157
      %p159 = scmp.ne.s32.totalorder %s145, %s146
      %p160 = scmp.eq.s32.totalorder %s24, 5
      %p161 = por %p159, %p160
      %p163 = scmp.ne.s32.totalorder %s146, %s162
      %p164 = scmp.eq.s32.totalorder %s24, 0
      %p165 = por %p163, %p164
      %p166 = scmp.le.s32.totalorder 1, %s18
      %p167 = scmp.lt.s32.totalorder %s18, 7
      %p168 = pnand %p166, %p167
      %p169 = pneg %p168
      // Predicated region
      $region9: #{tpu_custom_call.1} parent=5 // pred_check
        _
      $region10: #{tpu_custom_call.1} parent=5 // pred_check_branch
        %171 = sbr.rel (%p168) target = $region12
      $region11: #{tpu_custom_call.1} parent=5 // pred_region
        %s172 = ssub.s32 %s18, 1
      $region12: #{tpu_custom_call.1} parent=5 // pred_fallthru
        _
      %p173 = scmp.lt.s32.totalorder %s18, 6
      // Predicated region
      $region13: #{tpu_custom_call.1} parent=5 // pred_check
        %p174 = pneg %p173
      $region14: #{tpu_custom_call.1} parent=5 // pred_check_branch
        %176 = sbr.rel (%p174) target = $region16
      $region15: #{tpu_custom_call.1} parent=5 // pred_region
        // Predicated region
        $region17: #{tpu_custom_call.1} parent=15 // pred_check
          %p177 = pneg %p68
        $region18: #{tpu_custom_call.1} parent=15 // pred_check_branch
          %179 = sbr.rel (%p177) target = $region20
        $region19: #{tpu_custom_call.1} parent=15 // pred_region
          %s180 = sand.u32 %s58, 1
          %s181 = scalar_lea.sflag [#allocation4], %s180
          %s182 = sand.u32 %s58, 1
          %s183 = smul.addr %s182, 8
          %s184 = scalar_lea.vmem [#allocation3], %s183
          %186 = vsyncadd %s181, 0
          %s187 = sadd.s32 %s28, %s26
          %s188 = sadd.s32 %s187, %s25
          %s189 = smul.addr %s188, 8
          %s190 = scalar_lea.hbm %s0, %s189
          %s192 = sshll.u32 %s190, 4
          %s193 = int_to_ptr.hbm [resolvable:$true] %s192
          %s194 = sshll.u32 %s184, 4
          %s195 = int_to_ptr.vmem [resolvable:$true] %s194
          %197 = dma.hbm_to_vmem [thread:$0]  %s193, 128, %s195, %s181
        $region20: #{tpu_custom_call.1} parent=15 // pred_fallthru
          _
        // Predicated region
        $region21: #{tpu_custom_call.1} parent=15 // pred_check
          %p198 = pneg %p96
        $region22: #{tpu_custom_call.1} parent=15 // pred_check_branch
          %200 = sbr.rel (%p198) target = $region24
        $region23: #{tpu_custom_call.1} parent=15 // pred_region
          %s201 = sand.u32 %s18, 1
          %s202 = scalar_lea.sflag [#allocation7], %s201
          %s203 = sand.u32 %s86, 1
          %s204 = smul.addr %s203, 64
          %s205 = scalar_lea.vmem [#allocation6], %s204
          %s206 = smul.u32 8, %s28
          %208 = vsyncadd %s202, 0
          %s209 = smul.addr %s27, 8
          %s210 = sadd.s32 %s206, %s209
          %s211 = smul.addr %s210, 8
          %s212 = scalar_lea.hbm %s1, %s211
          %s213 = sshll.u32 %s212, 4
          %s214 = int_to_ptr.hbm [resolvable:$true] %s213
          %s215 = sshll.u32 %s205, 4
          %s216 = int_to_ptr.vmem [resolvable:$true] %s215
          %221 = dma.hbm_to_vmem [thread:$0]  %s214, 1024, %s216, %s202, 128, 128, 8
        $region24: #{tpu_custom_call.1} parent=15 // pred_fallthru
          _
        // Predicated region
        $region25: #{tpu_custom_call.1} parent=15 // pred_check
          %p222 = pneg %p122
        $region26: #{tpu_custom_call.1} parent=15 // pred_check_branch
          %224 = sbr.rel (%p222) target = $region28
        $region27: #{tpu_custom_call.1} parent=15 // pred_region
          %s225 = sand.u32 %s18, 1
          %s226 = scalar_lea.sflag [#allocation7], %s225
          %s227 = sand.u32 %s112, 1
          %s228 = scalar_lea.vmem [#allocation8], %s227
          %230 = vsyncadd %s226, 0
          %s231 = scalar_lea.hbm %s2, %s27
          %s233 = sshll.u32 %s231, 4
          %s234 = int_to_ptr.hbm [resolvable:$true] %s233
          %s235 = sshll.u32 %s228, 4
          %s236 = int_to_ptr.vmem [resolvable:$true] %s235
          %238 = dma.hbm_to_vmem [thread:$0]  %s234, 16, %s236, %s226
        $region28: #{tpu_custom_call.1} parent=15 // pred_fallthru
          _
      $region16: #{tpu_custom_call.1} parent=5 // pred_fallthru
        _
      %p239 = scmp.le.s32.totalorder 1, %s18
      %p240 = scmp.lt.s32.totalorder %s18, 7
      %p241 = pnand %p239, %p240
      %p242 = pneg %p241
      // Predicated region
      $region29: #{tpu_custom_call.1} parent=5 // pred_check
        _
      $region30: #{tpu_custom_call.1} parent=5 // pred_check_branch
        %244 = sbr.rel (%p241) target = $region32
      $region31: #{tpu_custom_call.1} parent=5 // pred_region
        %s245 = ssub.s32 %s18, 1
        %s246 = sand.u32 %s61, 1
        %s247 = scalar_lea.sflag [#allocation4], %s246
        %s248 = sand.u32 %s61, 1
        %s249 = smul.addr %s248, 8
        %s250 = scalar_lea.vmem [#allocation3], %s249
        // Predicated region
        $region33: #{tpu_custom_call.1} parent=31 // pred_check
          %p251 = pneg %p74
        $region34: #{tpu_custom_call.1} parent=31 // pred_check_branch
          %253 = sbr.rel (%p251) target = $region36
        $region35: #{tpu_custom_call.1} parent=31 // pred_region
          %255 = dma.done %s247, 128
        $region36: #{tpu_custom_call.1} parent=31 // pred_fallthru
          _
        %s256 = sand.u32 %s23, 1
        %s257 = scalar_lea.sflag [#allocation7], %s256
        %s258 = sand.u32 %s89, 1
        %s259 = smul.addr %s258, 64
        %s260 = scalar_lea.vmem [#allocation6], %s259
        // Predicated region
        $region37: #{tpu_custom_call.1} parent=31 // pred_check
          %p261 = pneg %p102
        $region38: #{tpu_custom_call.1} parent=31 // pred_check_branch
          %263 = sbr.rel (%p261) target = $region40
        $region39: #{tpu_custom_call.1} parent=31 // pred_region
          %265 = dma.done %s257, 1024
        $region40: #{tpu_custom_call.1} parent=31 // pred_fallthru
          _
        %s266 = sand.u32 %s23, 1
        %s267 = scalar_lea.sflag [#allocation7], %s266
        %s268 = sand.u32 %s115, 1
        %s269 = scalar_lea.vmem [#allocation8], %s268
        // Predicated region
        $region41: #{tpu_custom_call.1} parent=31 // pred_check
          %p270 = pneg %p128
        $region42: #{tpu_custom_call.1} parent=31 // pred_check_branch
          %272 = sbr.rel (%p270) target = $region44
        $region43: #{tpu_custom_call.1} parent=31 // pred_region
          %274 = dma.done %s267, 16
        $region44: #{tpu_custom_call.1} parent=31 // pred_fallthru
          _
        %s275 = sand.u32 %s61, 1
        %s276 = scalar_lea.sflag [#allocation4], %s275
        %s277 = sand.u32 %s61, 1
        %s278 = smul.addr %s277, 8
        %s279 = scalar_lea.vmem [#allocation3], %s278
        %p280 = pneg %p74
        %p281 = pneg %p71
        %s282 = sand.u32 %s23, 1
        %s283 = scalar_lea.sflag [#allocation7], %s282
        %s284 = sand.u32 %s89, 1
        %s285 = smul.addr %s284, 64
        %s286 = scalar_lea.vmem [#allocation6], %s285
        %p287 = pneg %p102
        %p288 = pneg %p99
        %s289 = sand.u32 %s23, 1
        %s290 = scalar_lea.sflag [#allocation7], %s289
        %s291 = sand.u32 %s115, 1
        %s292 = scalar_lea.vmem [#allocation8], %s291
        %p293 = pneg %p128
        %p294 = pneg %p125
        %p295 = pneg %p158
        %p296 = pneg %p155
        %s297 = sand.u32 %s145, 1
        %s298 = scalar_lea.sflag [#allocation5], %s297
        %s299 = sand.u32 %s145, 1
        %s300 = smul.addr %s299, 8
        %s301 = scalar_lea.vmem [#allocation9], %s300
        %s302 = smul.u32 8, %s32
        %p303 = scmp.eq.s32.totalorder %s32, 0
        // Predicated region
        $region45: #{tpu_custom_call.1} parent=31 // pred_check
          %p304 = pneg %p303
        $region46: #{tpu_custom_call.1} parent=31 // pred_check_branch
          %306 = sbr.rel (%p304) target = $region48
        $region47: #{tpu_custom_call.1} parent=31 // pred_region
          %vm307 = vcmask 523264
          %308 = vst.msk [vmem:[#allocation2] sm:$0xff] %vm307, 0.0
        $region48: #{tpu_custom_call.1} parent=31 // pred_fallthru
          _
        %v309 = vld [vmem:[#allocation2] sm:$0xff]
        %v310 = vld [vmem:[%s250] sm:$0xff]
        %v311 = vld [vmem:[%s260] sm:$0xff]
        %v312 = vld [vmem:[%s260 + $0x8] sm:$0xff]
        %v313 = vld [vmem:[%s260 + $0x10] sm:$0xff]
        %v314 = vld [vmem:[%s260 + $0x18] sm:$0xff]
        %v315 = vld [vmem:[%s260 + $0x20] sm:$0xff]
        %v316 = vld [vmem:[%s260 + $0x28] sm:$0xff]
        %v317 = vld [vmem:[%s260 + $0x30] sm:$0xff]
        %v318 = vld [vmem:[%s260 + $0x38] sm:$0xff]
        %vm319 = vcmask 523264
        %v321 = vsel %vm319, %v310, 0
        %323 = vmatpush.msra.mxu0 0.0
        %324 = vmatpush.msra.mxu0 0.0
        %325 = vmatpush.msra.mxu0 0.0
        %326 = vmatpush.msra.mxu0 0.0
        %327 = vmatpush.msra.mxu0 0.0
        %328 = vmatpush.msra.mxu0 0.0
        %329 = vmatpush.msra.mxu0 0.0
        %330 = vmatpush.msra.mxu0 0.0
        %331 = vmatpush.msra.mxu0 %v318
        %332 = vmatpush.msra.mxu0 %v317
        %333 = vmatpush.msra.mxu0 %v316
        %334 = vmatpush.msra.mxu0 %v315
        %335 = vmatpush.msra.mxu0 %v314
        %336 = vmatpush.msra.mxu0 %v313
        %337 = vmatpush.msra.mxu0 %v312
        %338 = vmatpush.msra.mxu0 %v311
        %339 = vmatmul.f32.gmra.mxu0 %v321
        %v340 = vpop.f32.mrf.mxu0
        %v341 = vadd.f32 0.0, %v340
        %342 = vdwg.mxu0
        %v343 = vadd.f32 %v309, %v341
        %344 = vst.msk [vmem:[#allocation2] sm:$0xff] %vm319, %v343
        // Predicated region
        $region49: #{tpu_custom_call.1} parent=31 // pred_check
          %p345 = pneg %p303
        $region50: #{tpu_custom_call.1} parent=31 // pred_check_branch
          %347 = sbr.rel (%p345) target = $region52
        $region51: #{tpu_custom_call.1} parent=31 // pred_region
          %v348 = vld [vmem:[#allocation2] sm:$0xff]
          %v349 = vld [vmem:[%s269] sm:$0x1]
          %v351 = vperm.slane %v349, 0
          %v353 = vadd.f32 %v348, %v351
          %354 = vst.msk [vmem:[%s301] sm:$0xff] %vm319, %v353
        $region52: #{tpu_custom_call.1} parent=31 // pred_fallthru
          _
        %s355 = sand.u32 %s145, 1
        %s356 = scalar_lea.sflag [#allocation5], %s355
        %s357 = sand.u32 %s145, 1
        %s358 = smul.addr %s357, 8
        %s359 = scalar_lea.vmem [#allocation9], %s358
        // Predicated region
        $region53: #{tpu_custom_call.1} parent=31 // pred_check
          %p360 = pneg %p155
        $region54: #{tpu_custom_call.1} parent=31 // pred_check_branch
          %362 = sbr.rel (%p360) target = $region56
        $region55: #{tpu_custom_call.1} parent=31 // pred_region
          %364 = vsyncadd %s356, 0
          %s365 = sadd.s32 %s30, %s29
          %s366 = smul.addr %s31, 2
          %s367 = sadd.s32 %s365, %s366
          %s368 = smul.addr %s367, 8
          %s369 = scalar_lea.hbm %s3, %s368
          %s371 = sshll.u32 %s359, 4
          %s372 = int_to_ptr.vmem [resolvable:$true] %s371
          %s373 = sshll.u32 %s369, 4
          %s374 = int_to_ptr.hbm [resolvable:$true] %s373
          %376 = dma.vmem_to_hbm [thread:$0]  %s372, 128, %s374, %s356
        $region56: #{tpu_custom_call.1} parent=31 // pred_fallthru
          _
      $region32: #{tpu_custom_call.1} parent=5 // pred_fallthru
        _
      %p377 = scmp.le.s32.totalorder 2, %s18
      // Predicated region
      $region57: #{tpu_custom_call.1} parent=5 // pred_check
        %p378 = pneg %p377
      $region58: #{tpu_custom_call.1} parent=5 // pred_check_branch
        %380 = sbr.rel (%p378) target = $region60
      $region59: #{tpu_custom_call.1} parent=5 // pred_region
        %s381 = ssub.s32 %s18, 2
        // Predicated region
        $region61: #{tpu_custom_call.1} parent=59 // pred_check
          %p382 = pneg %p161
        $region62: #{tpu_custom_call.1} parent=59 // pred_check_branch
          %384 = sbr.rel (%p382) target = $region64
        $region63: #{tpu_custom_call.1} parent=59 // pred_region
          %s385 = sand.u32 %s146, 1
          %s386 = scalar_lea.sflag [#allocation5], %s385
          %s387 = sand.u32 %s146, 1
          %s388 = smul.addr %s387, 8
          %s389 = scalar_lea.vmem [#allocation9], %s388
          %391 = dma.done %s386, 128
        $region64: #{tpu_custom_call.1} parent=59 // pred_fallthru
          _
      $region60: #{tpu_custom_call.1} parent=5 // pred_fallthru
        _
    $region6: #{tpu_custom_call.1} parent=1 // loop_footer
      %s22 = sadd.s32 1, %s18
    $region7: #{tpu_custom_call.1} parent=1 // loop_footer_branch
      %17 = sbr.rel target = $region3
    $region8: #{tpu_custom_call.1} parent=1 // loop_exit
      _
    %392 = vsyncpa [#allocation4], 1
    %s393 = scalar_lea.sflag [#allocation4], 1
    %394 = vsyncpa %s393, 1
    %395 = vsyncpa [#allocation7], 1
    %s396 = scalar_lea.sflag [#allocation7], 1
    %397 = vsyncpa %s396, 1
    %398 = vsyncpa [#allocation5], 1
    %s399 = scalar_lea.sflag [#allocation5], 1
    %400 = vsyncpa %s399, 1

</llo_original>
